<compile_context>
chip_gen: v7x
topology: tpu7x:2x2x1
jax: 0.10.0
libtpu: 0.0.40
codegen_flags: <defaults>
</compile_context>

<pallas_src>
import functools

import jax
import jax.numpy as jnp
from jax.experimental import pallas as pl
from jax.experimental.pallas import tpu as pltpu


# ----------------------------- helpers --------------------------------------

def _pick_tile(size, pref):
    """Use `pref` if it evenly tiles `size`, else fall back to full extent
    (full-extent blocks are always layout-legal)."""
    return pref if size % pref == 0 else size


# ----------------------------- Pallas kernels -------------------------------

def _qkv_proj_kernel(x_ref, wq_ref, wk_ref, wv_ref,   # inputs
                     q_ref, k_ref, v_ref,             # outputs
                     qacc, kacc, vacc):               # f32 VMEM accumulators
    # grid = (M // tm, K // tk); axis 1 is the contraction (reduction) axis.
    @pl.when(pl.program_id(1) == 0)
    def _():
        qacc[...] = jnp.zeros_like(qacc)
        kacc[...] = jnp.zeros_like(kacc)
        vacc[...] = jnp.zeros_like(vacc)

    x = x_ref[...]                                    # (tm, tk) — one load, 3 matmuls
    qacc[...] += jnp.dot(x, wq_ref[...], preferred_element_type=jnp.float32)
    kacc[...] += jnp.dot(x, wk_ref[...], preferred_element_type=jnp.float32)
    vacc[...] += jnp.dot(x, wv_ref[...], preferred_element_type=jnp.float32)

    @pl.when(pl.program_id(1) == pl.num_programs(1) - 1)
    def _():
        q_ref[...] = qacc[...].astype(q_ref.dtype)
        k_ref[...] = kacc[...].astype(k_ref.dtype)
        v_ref[...] = vacc[...].astype(v_ref.dtype)


def _attn_out_kernel(q_ref, k_ref, v_ref, wo_ref, bo_ref, o_ref,
                     *, heads, dim_head, scale):
    # q_ref: (1, tq, inner)   k_ref/v_ref: (1, N, inner)   ('b n (h d)' layout)
    # wo_ref: (inner, dim)    bo_ref: (1, dim)             o_ref: (1, tq, dim)
    q = q_ref[0] * scale                      # fold softmax scale into q: O(tq*inner)
    k = k_ref[0]
    v = v_ref[0]

    outs = []
    for h in range(heads):                    # static unrolled loop over heads
        lo = h * dim_head
        hi = lo + dim_head
        qh = q[:, lo:hi]                      # (tq, Dh)
        kh = k[:, lo:hi]                      # (N, Dh)
        vh = v[:, lo:hi]                      # (N, Dh)

        # contraction over Dh without materializing k^T (MXU-native)
        dots = jax.lax.dot_general(
            qh, kh, (((1,), (1,)), ((), ())),
            preferred_element_type=jnp.float32)        # (tq, N)

        # numerically-stable softmax (f32); denom reciprocal on the EUP slot
        m = jnp.max(dots, axis=-1, keepdims=True)
        p = jnp.exp(dots - m)
        denom = jnp.sum(p, axis=-1, keepdims=True)
        attn = p * pl.reciprocal(denom, approx=True)

        outs.append(jnp.dot(attn.astype(vh.dtype), vh,
                            preferred_element_type=jnp.float32))  # (tq, Dh)

    out = jnp.concatenate(outs, axis=-1)      # (tq, inner) — 'b n (h d)' merge, in-VMEM

    # fused output projection epilogue: out @ W_out + b_out
    y = jnp.dot(out.astype(wo_ref.dtype), wo_ref[...],
                preferred_element_type=jnp.float32) + bo_ref[...]
    o_ref[0] = y.astype(o_ref.dtype)


# ----------------------------- Python wrappers ------------------------------

def qkv_projection(x2d, w_q, w_k, w_v, *, tm=256, tk=512):
    """x2d: (M, dim); w_*: (dim, inner). Returns q, k, v each (M, inner)."""
    M, K = x2d.shape
    inner = w_q.shape[1]
    tm = _pick_tile(M, tm)
    tk = _pick_tile(K, tk)
    grid = (M // tm, K // tk)

    x_spec = pl.BlockSpec((tm, tk), lambda i, kk: (i, kk))
    w_spec = pl.BlockSpec((tk, inner), lambda i, kk: (kk, 0))
    o_spec = pl.BlockSpec((tm, inner), lambda i, kk: (i, 0))

    return pl.pallas_call(
        _qkv_proj_kernel,
        out_shape=tuple(jax.ShapeDtypeStruct((M, inner), x2d.dtype)
                        for _ in range(3)),
        grid=grid,
        in_specs=[x_spec, w_spec, w_spec, w_spec],
        out_specs=(o_spec, o_spec, o_spec),
        scratch_shapes=[pltpu.VMEM((tm, inner), jnp.float32) for _ in range(3)],
        compiler_params=pltpu.CompilerParams(
            dimension_semantics=("parallel", "arbitrary")),
    )(x2d, w_q, w_k, w_v)


def fused_attention(q, k, v, w_out, b_out2d, *, heads, dim_head, scale, tq=256):
    """q,k,v: (B, N, inner) in 'b n (h d)' layout. Returns (B, N, dim)."""
    B, N, inner = q.shape
    dim = w_out.shape[1]
    tq = _pick_tile(N, tq)
    grid = (B, N // tq)

    kernel = functools.partial(_attn_out_kernel,
                               heads=heads, dim_head=dim_head, scale=scale)
    return pl.pallas_call(
        kernel,
        out_shape=jax.ShapeDtypeStruct((B, N, dim), q.dtype),
        grid=grid,
        in_specs=[
            pl.BlockSpec((1, tq, inner), lambda b, i: (b, i, 0)),   # q tile
            pl.BlockSpec((1, N, inner), lambda b, i: (b, 0, 0)),    # k (per-batch)
            pl.BlockSpec((1, N, inner), lambda b, i: (b, 0, 0)),    # v (per-batch)
            pl.BlockSpec((inner, dim), lambda b, i: (0, 0)),        # W_out resident
            pl.BlockSpec((1, dim), lambda b, i: (0, 0)),            # b_out resident
        ],
        out_specs=pl.BlockSpec((1, tq, dim), lambda b, i: (b, i, 0)),
        compiler_params=pltpu.CompilerParams(
            dimension_semantics=("parallel", "parallel")),
    )(q, k, v, w_out, b_out2d)


def attention_forward(x, params, *, heads, dim_head):
    """Pallas implementation of Attention.forward. x: [B, N, dim]."""
    B, N, dim = x.shape
    inner_dim = heads * dim_head
    scale = dim_head ** (-0.5)

    # One-off parameter-side split of the QKV weight (not an activation copy).
    w_q, w_k, w_v = jnp.split(params["w_qkv"], 3, axis=1)   # each (dim, inner)

    # Fused QKV projection: one pass over x -> q, k, v (no activation split).
    q, k, v = qkv_projection(x.reshape(B * N, dim), w_q, w_k, w_v)
    q = q.reshape(B, N, inner_dim)     # contiguous reshape: metadata only
    k = k.reshape(B, N, inner_dim)
    v = v.reshape(B, N, inner_dim)

    # Fused attention + output projection (+ bias); dropout=0.0 is a no-op.
    b_out2d = params["b_out"].reshape(1, dim)
    return fused_attention(q, k, v, params["w_out"], b_out2d,
                           heads=heads, dim_head=dim_head, scale=scale)
    # TODO(synk): project_out==False (heads==1 and dim_head==dim) would make
    # to_out an Identity; this implementation covers the project_out path.


# ----------------------------- reference (plain JAX) ------------------------

def attention_reference(x, params, *, heads, dim_head):
    B, N, dim = x.shape
    inner_dim = heads * dim_head
    scale = dim_head ** (-0.5)
    qkv = x @ params["w_qkv"]
    q, k, v = jnp.split(qkv, 3, axis=-1)
    q = q.reshape(B, N, heads, dim_head).transpose(0, 2, 1, 3)
    k = k.reshape(B, N, heads, dim_head).transpose(0, 2, 1, 3)
    v = v.reshape(B, N, heads, dim_head).transpose(0, 2, 1, 3)
    dots = jnp.einsum("bhnd,bhmd->bhnm", q, k) * scale
    attn = jax.nn.softmax(dots, axis=-1)
    out = jnp.einsum("bhnm,bhmd->bhnd", attn, v)
    out = out.transpose(0, 2, 1, 3).reshape(B, N, inner_dim)
    return out @ params["w_out"] + params["b_out"]


# ----------------------------- main ------------------------------------------

if __name__ == "__main__":
    B, N, dim = 2, 8, 32
    heads, dim_head = 4, 16
    inner_dim = heads * dim_head

    key = jax.random.PRNGKey(0)
    kx, kqkv, kwo, kbo = jax.random.split(key, 4)

    x = jax.random.normal(kx, (B, N, dim), dtype=jnp.float32)
    params = {
        # nn.Linear(dim, inner_dim*3, bias=False) weight, stored as (in, out)
        "w_qkv": jax.random.normal(kqkv, (dim, 3 * inner_dim), jnp.float32) * 0.05,
        # nn.Linear(inner_dim, dim) weight + bias
        "w_out": jax.random.normal(kwo, (inner_dim, dim), jnp.float32) * 0.05,
        "b_out": jax.random.normal(kbo, (dim,), jnp.float32) * 0.05,
    }

    y = attention_forward(x, params, heads=heads, dim_head=dim_head)
    y = jax.block_until_ready(y)

    y_ref = attention_reference(x, params, heads=heads, dim_head=dim_head)
    assert y.shape == (B, N, dim)
    # approx=True reciprocal (EUP) is used for the softmax denom -> slightly
    # looser tolerance than exact-reciprocal math.
    assert jnp.allclose(y, y_ref, atol=5e-3, rtol=5e-3), "mismatch vs reference"

    print("KERNEL_OK")
</pallas_src>

<mosaic_0001>
module attributes {stable_mosaic.version = 11 : i64} {
  func.func @_qkv_proj_kernel(%arg0: i32, %arg1: i32, %arg2: memref<16x32xf32, #tpu.memory_space<vmem>>, %arg3: memref<32x64xf32, #tpu.memory_space<vmem>>, %arg4: memref<32x64xf32, #tpu.memory_space<vmem>>, %arg5: memref<32x64xf32, #tpu.memory_space<vmem>>, %arg6: memref<16x64xf32, #tpu.memory_space<vmem>>, %arg7: memref<16x64xf32, #tpu.memory_space<vmem>>, %arg8: memref<16x64xf32, #tpu.memory_space<vmem>>, %arg9: memref<16x64xf32, #tpu.memory_space<vmem>>, %arg10: memref<16x64xf32, #tpu.memory_space<vmem>>, %arg11: memref<16x64xf32, #tpu.memory_space<vmem>>) attributes {dimension_semantics = [#tpu.dimension_semantics<parallel>, #tpu.dimension_semantics<arbitrary>], iteration_bounds = array<i64: 1, 1>, scalar_prefetch = 0 : i64, scratch_operands = 3 : i64, tpu.core_type = #tpu.core_type<tc>, window_params = [{transform_indices = @transform_0, window_bounds = array<i64: 16, 32>}, {transform_indices = @transform_1, window_bounds = array<i64: 32, 64>}, {transform_indices = @transform_2, window_bounds = array<i64: 32, 64>}, {transform_indices = @transform_3, window_bounds = array<i64: 32, 64>}, {transform_indices = @transform_4, window_bounds = array<i64: 16, 64>}, {transform_indices = @transform_5, window_bounds = array<i64: 16, 64>}, {transform_indices = @transform_6, window_bounds = array<i64: 16, 64>}]} {
    %c0_i32 = arith.constant 0 : i32
    %0 = arith.cmpi eq, %arg1, %c0_i32 : i32
    %1 = arith.extui %0 : i1 to i32
    %c0_i32_0 = arith.constant 0 : i32
    %2 = arith.cmpi ne, %1, %c0_i32_0 : i32
    scf.if %2 {
      %cst_24 = arith.constant 0.000000e+00 : f32
      %22 = vector.broadcast %cst_24 : f32 to vector<16x64xf32>
      %c0_25 = arith.constant 0 : index
      %c0_26 = arith.constant 0 : index
      %23 = vector.load %arg9[%c0_25, %c0_26] : memref<16x64xf32, #tpu.memory_space<vmem>>, vector<16x64xf32>
      tpu.vector_store %arg9[%c0_25, %c0_26], %22 {strides = array<i32>} : memref<16x64xf32, #tpu.memory_space<vmem>>, vector<16x64xf32>,
      %cst_27 = arith.constant 0.000000e+00 : f32
      %24 = vector.broadcast %cst_27 : f32 to vector<16x64xf32>
      %c0_28 = arith.constant 0 : index
      %c0_29 = arith.constant 0 : index
      %25 = vector.load %arg10[%c0_28, %c0_29] : memref<16x64xf32, #tpu.memory_space<vmem>>, vector<16x64xf32>
      tpu.vector_store %arg10[%c0_28, %c0_29], %24 {strides = array<i32>} : memref<16x64xf32, #tpu.memory_space<vmem>>, vector<16x64xf32>,
      %cst_30 = arith.constant 0.000000e+00 : f32
      %26 = vector.broadcast %cst_30 : f32 to vector<16x64xf32>
      %c0_31 = arith.constant 0 : index
      %c0_32 = arith.constant 0 : index
      %27 = vector.load %arg11[%c0_31, %c0_32] : memref<16x64xf32, #tpu.memory_space<vmem>>, vector<16x64xf32>
      tpu.vector_store %arg11[%c0_31, %c0_32], %26 {strides = array<i32>} : memref<16x64xf32, #tpu.memory_space<vmem>>, vector<16x64xf32>,
    } else {
    }
    %c0 = arith.constant 0 : index
    %c0_1 = arith.constant 0 : index
    %3 = vector.load %arg2[%c0, %c0_1] : memref<16x32xf32, #tpu.memory_space<vmem>>, vector<16x32xf32>
    %c0_2 = arith.constant 0 : index
    %c0_3 = arith.constant 0 : index
    %4 = vector.load %arg9[%c0_2, %c0_3] : memref<16x64xf32, #tpu.memory_space<vmem>>, vector<16x64xf32>
    %c0_4 = arith.constant 0 : index
    %c0_5 = arith.constant 0 : index
    %5 = vector.load %arg3[%c0_4, %c0_5] : memref<32x64xf32, #tpu.memory_space<vmem>>, vector<32x64xf32>
    %cst = arith.constant dense<0.000000e+00> : vector<16x64xf32>
    %6 = tpu.matmul %3, %5, %cst {dimension_numbers = #tpu.dot_dimension_numbers<[1], [0], [0], [1], [0, 0, 1, 1], [], []>} : vector<16x32xf32>, vector<32x64xf32>, vector<16x64xf32> -> vector<16x64xf32>
    %7 = arith.addf %4, %6 : vector<16x64xf32>
    %c0_6 = arith.constant 0 : index
    %c0_7 = arith.constant 0 : index
    %8 = vector.load %arg9[%c0_6, %c0_7] : memref<16x64xf32, #tpu.memory_space<vmem>>, vector<16x64xf32>
    tpu.vector_store %arg9[%c0_6, %c0_7], %7 {strides = array<i32>} : memref<16x64xf32, #tpu.memory_space<vmem>>, vector<16x64xf32>,
    %c0_8 = arith.constant 0 : index
    %c0_9 = arith.constant 0 : index
    %9 = vector.load %arg10[%c0_8, %c0_9] : memref<16x64xf32, #tpu.memory_space<vmem>>, vector<16x64xf32>
    %c0_10 = arith.constant 0 : index
    %c0_11 = arith.constant 0 : index
    %10 = vector.load %arg4[%c0_10, %c0_11] : memref<32x64xf32, #tpu.memory_space<vmem>>, vector<32x64xf32>
    %cst_12 = arith.constant dense<0.000000e+00> : vector<16x64xf32>
    %11 = tpu.matmul %3, %10, %cst_12 {dimension_numbers = #tpu.dot_dimension_numbers<[1], [0], [0], [1], [0, 0, 1, 1], [], []>} : vector<16x32xf32>, vector<32x64xf32>, vector<16x64xf32> -> vector<16x64xf32>
    %12 = arith.addf %9, %11 : vector<16x64xf32>
    %c0_13 = arith.constant 0 : index
    %c0_14 = arith.constant 0 : index
    %13 = vector.load %arg10[%c0_13, %c0_14] : memref<16x64xf32, #tpu.memory_space<vmem>>, vector<16x64xf32>
    tpu.vector_store %arg10[%c0_13, %c0_14], %12 {strides = array<i32>} : memref<16x64xf32, #tpu.memory_space<vmem>>, vector<16x64xf32>,
    %c0_15 = arith.constant 0 : index
    %c0_16 = arith.constant 0 : index
    %14 = vector.load %arg11[%c0_15, %c0_16] : memref<16x64xf32, #tpu.memory_space<vmem>>, vector<16x64xf32>
    %c0_17 = arith.constant 0 : index
    %c0_18 = arith.constant 0 : index
    %15 = vector.load %arg5[%c0_17, %c0_18] : memref<32x64xf32, #tpu.memory_space<vmem>>, vector<32x64xf32>
    %cst_19 = arith.constant dense<0.000000e+00> : vector<16x64xf32>
    %16 = tpu.matmul %3, %15, %cst_19 {dimension_numbers = #tpu.dot_dimension_numbers<[1], [0], [0], [1], [0, 0, 1, 1], [], []>} : vector<16x32xf32>, vector<32x64xf32>, vector<16x64xf32> -> vector<16x64xf32>
    %17 = arith.addf %14, %16 : vector<16x64xf32>
    %c0_20 = arith.constant 0 : index
    %c0_21 = arith.constant 0 : index
    %18 = vector.load %arg11[%c0_20, %c0_21] : memref<16x64xf32, #tpu.memory_space<vmem>>, vector<16x64xf32>
    tpu.vector_store %arg11[%c0_20, %c0_21], %17 {strides = array<i32>} : memref<16x64xf32, #tpu.memory_space<vmem>>, vector<16x64xf32>,
    %c0_i32_22 = arith.constant 0 : i32
    %19 = arith.cmpi eq, %arg1, %c0_i32_22 : i32
    %20 = arith.extui %19 : i1 to i32
    %c0_i32_23 = arith.constant 0 : i32
    %21 = arith.cmpi ne, %20, %c0_i32_23 : i32
    scf.if %21 {
      %c0_24 = arith.constant 0 : index
      %c0_25 = arith.constant 0 : index
      %22 = vector.load %arg9[%c0_24, %c0_25] : memref<16x64xf32, #tpu.memory_space<vmem>>, vector<16x64xf32>
      %c0_26 = arith.constant 0 : index
      %c0_27 = arith.constant 0 : index
      %23 = vector.load %arg6[%c0_26, %c0_27] : memref<16x64xf32, #tpu.memory_space<vmem>>, vector<16x64xf32>
      tpu.vector_store %arg6[%c0_26, %c0_27], %22 {strides = array<i32>} : memref<16x64xf32, #tpu.memory_space<vmem>>, vector<16x64xf32>,
      %c0_28 = arith.constant 0 : index
      %c0_29 = arith.constant 0 : index
      %24 = vector.load %arg10[%c0_28, %c0_29] : memref<16x64xf32, #tpu.memory_space<vmem>>, vector<16x64xf32>
      %c0_30 = arith.constant 0 : index
      %c0_31 = arith.constant 0 : index
      %25 = vector.load %arg7[%c0_30, %c0_31] : memref<16x64xf32, #tpu.memory_space<vmem>>, vector<16x64xf32>
      tpu.vector_store %arg7[%c0_30, %c0_31], %24 {strides = array<i32>} : memref<16x64xf32, #tpu.memory_space<vmem>>, vector<16x64xf32>,
      %c0_32 = arith.constant 0 : index
      %c0_33 = arith.constant 0 : index
      %26 = vector.load %arg11[%c0_32, %c0_33] : memref<16x64xf32, #tpu.memory_space<vmem>>, vector<16x64xf32>
      %c0_34 = arith.constant 0 : index
      %c0_35 = arith.constant 0 : index
      %27 = vector.load %arg8[%c0_34, %c0_35] : memref<16x64xf32, #tpu.memory_space<vmem>>, vector<16x64xf32>
      tpu.vector_store %arg8[%c0_34, %c0_35], %26 {strides = array<i32>} : memref<16x64xf32, #tpu.memory_space<vmem>>, vector<16x64xf32>,
    } else {
    }
    return
  }
  func.func @transform_0(%arg0: i32, %arg1: i32) -> (i32, i32) {
    %c0_i32 = arith.constant 0 : i32
    return %arg0, %arg1 : i32, i32
  }
  func.func @transform_1(%arg0: i32, %arg1: i32) -> (i32, i32) {
    %c0_i32 = arith.constant 0 : i32
    %c0_i32_0 = arith.constant 0 : i32
    return %arg1, %c0_i32 : i32, i32
  }
  func.func @transform_2(%arg0: i32, %arg1: i32) -> (i32, i32) {
    %c0_i32 = arith.constant 0 : i32
    %c0_i32_0 = arith.constant 0 : i32
    return %arg1, %c0_i32 : i32, i32
  }
  func.func @transform_3(%arg0: i32, %arg1: i32) -> (i32, i32) {
    %c0_i32 = arith.constant 0 : i32
    %c0_i32_0 = arith.constant 0 : i32
    return %arg1, %c0_i32 : i32, i32
  }
  func.func @transform_4(%arg0: i32, %arg1: i32) -> (i32, i32) {
    %c0_i32 = arith.constant 0 : i32
    %c0_i32_0 = arith.constant 0 : i32
    return %arg0, %c0_i32 : i32, i32
  }
  func.func @transform_5(%arg0: i32, %arg1: i32) -> (i32, i32) {
    %c0_i32 = arith.constant 0 : i32
    %c0_i32_0 = arith.constant 0 : i32
    return %arg0, %c0_i32 : i32, i32
  }
  func.func @transform_6(%arg0: i32, %arg1: i32) -> (i32, i32) {
    %c0_i32 = arith.constant 0 : i32
    %c0_i32_0 = arith.constant 0 : i32
    return %arg0, %c0_i32 : i32, i32
  }
}

</mosaic_0001>

<llo_original>
// kernel: tpu_custom_call.1
$region0: #{tpu_custom_call.1}
  #allocation0 [shape = 'u32[]', space=smem, size = 0x4, offset = 0x4, fixed_abs, tag = 'smem constant byte address 0x4 - core index']
  #allocation1 [shape = 'u32[144,128]{1,0:T(1,128)}', space=vmem, size = 0x12000, scoped, tag = 'internal scratch']
  #allocation2 [shape = 'f32[16,64]{1,0:T(8,128)}', space=vmem, size = 0x2000, scoped, tag = 'scratch operand']
  #allocation3 [shape = 'f32[16,64]{1,0:T(8,128)}', space=vmem, size = 0x2000, scoped, tag = 'scratch operand']
  #allocation4 [shape = 'f32[16,64]{1,0:T(8,128)}', space=vmem, size = 0x2000, scoped, tag = 'scratch operand']
  %s0 = inlined_call_operand.hbm [shape: f32[16,32], index: 0, kind: input, shape index: {}]
  %s1 = inlined_call_operand.hbm [shape: f32[32,64], index: 1, kind: input, shape index: {}]
  %s2 = inlined_call_operand.hbm [shape: f32[32,64], index: 2, kind: input, shape index: {}]
  %s3 = inlined_call_operand.hbm [shape: f32[32,64], index: 3, kind: input, shape index: {}]
  %s4 = inlined_call_operand.hbm [shape: f32[16,64], index: 4, kind: output, shape index: {0}]
  %s5 = inlined_call_operand.hbm [shape: f32[16,64], index: 5, kind: output, shape index: {1}]
  %s6 = inlined_call_operand.hbm [shape: f32[16,64], index: 6, kind: output, shape index: {2}]
  %7 = xla_tuple %s4, %s5, %s6
  %s8 = sld [smem:[#allocation0]]
  $region66: #{tpu_custom_call.1} parent=0
    _
  %s10 = ssub.s32 1, %s8
  %s11 = scalar_select 0, %s10, %s8
  $region1: #{tpu_custom_call.1} parent=0
    #allocation5 [shape = 'u8[8192]{0}', space=vmem, size = 0x2000, scoped, tag = 'input window, operand 0, single buffered']
    #allocation6 [shape = 's32[1]{0}', space=sflag, size = 0x4, scoped, tag = 'scoped memory for tpu_custom_call.1']
    #allocation7 [shape = 's32[1]{0}', space=sflag, size = 0x4, scoped, tag = 'scoped memory for tpu_custom_call.1']
    #allocation8 [shape = 'u8[16384]{0}', space=vmem, size = 0x4000, scoped, tag = 'input window, operand 1, single buffered']
    #allocation9 [shape = 's32[1]{0}', space=sflag, size = 0x4, scoped, tag = 'scoped memory for tpu_custom_call.1']
    #allocation10 [shape = 'u8[16384]{0}', space=vmem, size = 0x4000, scoped, tag = 'input window, operand 2, single buffered']
    #allocation11 [shape = 'u8[16384]{0}', space=vmem, size = 0x4000, scoped, tag = 'input window, operand 3, single buffered']
    #allocation12 [shape = 's32[1]{0}', space=sflag, size = 0x4, scoped, tag = 'scoped memory for tpu_custom_call.1']
    #allocation13 [shape = 'u8[8192]{0}', space=vmem, size = 0x2000, scoped, tag = 'output window, operand 0, single buffered']
    #allocation14 [shape = 'u8[8192]{0}', space=vmem, size = 0x2000, scoped, tag = 'output window, operand 1, single buffered']
    #allocation15 [shape = 's32[1]{0}', space=sflag, size = 0x4, scoped, tag = 'scoped memory for tpu_custom_call.1']
    #allocation16 [shape = 'u8[8192]{0}', space=vmem, size = 0x2000, scoped, tag = 'output window, operand 2, single buffered']
    %12 = vsyncpa [#allocation6], 0
    %13 = vsyncpa [#allocation9], 0
    %14 = vsyncpa [#allocation12], 0
    %15 = vsyncpa [#allocation7], 0
    %16 = vsyncpa [#allocation15], 0
    // Predicated region
    $region2: #{tpu_custom_call.1} parent=1 // pred_check
      _
    $region3: #{tpu_custom_call.1} parent=1 // pred_check_branch
      %18 = sbr.rel (0) target = $region5
    $region4: #{tpu_custom_call.1} parent=1 // pred_region
      %s20 = ssub.s32 256, 256
      %21 = vsyncadd [#allocation6], %s20
      %s22 = sshll.u32 [#allocation5], 4
      %s23 = int_to_ptr.vmem [resolvable:$true] %s22
      %28 = dma.hbm_to_vmem [thread:$0]  %s0, 256, %s23, [#allocation6], 128, 128, 8
    $region5: #{tpu_custom_call.1} parent=1 // pred_fallthru
      _
    // Predicated region
    $region6: #{tpu_custom_call.1} parent=1 // pred_check
      _
    $region7: #{tpu_custom_call.1} parent=1 // pred_check_branch
      %30 = sbr.rel (0) target = $region9
    $region8: #{tpu_custom_call.1} parent=1 // pred_region
      %s32 = ssub.s32 512, 512
      %33 = vsyncadd [#allocation9], %s32
      %s34 = sshll.u32 [#allocation8], 4
      %s35 = int_to_ptr.vmem [resolvable:$true] %s34
      %40 = dma.hbm_to_vmem [thread:$0]  %s1, 512, %s35, [#allocation9], 128, 128, 8
    $region9: #{tpu_custom_call.1} parent=1 // pred_fallthru
      _
    // Predicated region
    $region10: #{tpu_custom_call.1} parent=1 // pred_check
      _
    $region11: #{tpu_custom_call.1} parent=1 // pred_check_branch
      %42 = sbr.rel (0) target = $region13
    $region12: #{tpu_custom_call.1} parent=1 // pred_region
      %s44 = ssub.s32 512, 512
      %45 = vsyncadd [#allocation9], %s44
      %s46 = sshll.u32 [#allocation10], 4
      %s47 = int_to_ptr.vmem [resolvable:$true] %s46
      %52 = dma.hbm_to_vmem [thread:$0]  %s2, 512, %s47, [#allocation9], 128, 128, 8
    $region13: #{tpu_custom_call.1} parent=1 // pred_fallthru
      _
    // Predicated region
    $region14: #{tpu_custom_call.1} parent=1 // pred_check
      _
    $region15: #{tpu_custom_call.1} parent=1 // pred_check_branch
      %54 = sbr.rel (0) target = $region17
    $region16: #{tpu_custom_call.1} parent=1 // pred_region
      %s56 = ssub.s32 512, 512
      %57 = vsyncadd [#allocation12], %s56
      %s58 = sshll.u32 [#allocation11], 4
      %s59 = int_to_ptr.vmem [resolvable:$true] %s58
      %64 = dma.hbm_to_vmem [thread:$0]  %s3, 512, %s59, [#allocation12], 128, 128, 8
    $region17: #{tpu_custom_call.1} parent=1 // pred_fallthru
      _
    // Predicated region
    $region18: #{tpu_custom_call.1} parent=1 // pred_check
      _
    $region19: #{tpu_custom_call.1} parent=1 // pred_check_branch
      %66 = sbr.rel (0) target = $region21
    $region20: #{tpu_custom_call.1} parent=1 // pred_region
      %67 = dma.done [#allocation6], 256
    $region21: #{tpu_custom_call.1} parent=1 // pred_fallthru
      _
    // Predicated region
    $region22: #{tpu_custom_call.1} parent=1 // pred_check
      _
    $region23: #{tpu_custom_call.1} parent=1 // pred_check_branch
      %69 = sbr.rel (0) target = $region25
    $region24: #{tpu_custom_call.1} parent=1 // pred_region
      %70 = dma.done [#allocation9], 512
    $region25: #{tpu_custom_call.1} parent=1 // pred_fallthru
      _
    // Predicated region
    $region26: #{tpu_custom_call.1} parent=1 // pred_check
      _
    $region27: #{tpu_custom_call.1} parent=1 // pred_check_branch
      %72 = sbr.rel (0) target = $region29
    $region28: #{tpu_custom_call.1} parent=1 // pred_region
      %73 = dma.done [#allocation9], 512
    $region29: #{tpu_custom_call.1} parent=1 // pred_fallthru
      _
    // Predicated region
    $region30: #{tpu_custom_call.1} parent=1 // pred_check
      _
    $region31: #{tpu_custom_call.1} parent=1 // pred_check_branch
      %75 = sbr.rel (0) target = $region33
    $region32: #{tpu_custom_call.1} parent=1 // pred_region
      %76 = dma.done [#allocation12], 512
    $region33: #{tpu_custom_call.1} parent=1 // pred_fallthru
      _
    %p77 = scmp.eq.s32.totalorder 0, 0
    // Predicated region
    $region34: #{tpu_custom_call.1} parent=1 // pred_check
      %p78 = pneg %p77
    $region35: #{tpu_custom_call.1} parent=1 // pred_check_branch
      %80 = sbr.rel (%p78) target = $region37
    $region36: #{tpu_custom_call.1} parent=1 // pred_region
      %vm81 = vcmask 523264
      %82 = vst.msk [vmem:[#allocation2] sm:$0xff] %vm81, 0.0
      %83 = vst.msk [vmem:[#allocation2 + $0x8] sm:$0xff] %vm81, 0.0
      %84 = vst.msk [vmem:[#allocation3] sm:$0xff] %vm81, 0.0
      %85 = vst.msk [vmem:[#allocation3 + $0x8] sm:$0xff] %vm81, 0.0
      %86 = vst.msk [vmem:[#allocation4] sm:$0xff] %vm81, 0.0
      %87 = vst.msk [vmem:[#allocation4 + $0x8] sm:$0xff] %vm81, 0.0
    $region37: #{tpu_custom_call.1} parent=1 // pred_fallthru
      _
    %v88 = vld [vmem:[#allocation5] sm:$0xff]
    %v89 = vld [vmem:[#allocation5 + $0x8] sm:$0xff]
    %v90 = vld [vmem:[#allocation2] sm:$0xff]
    %v91 = vld [vmem:[#allocation2 + $0x8] sm:$0xff]
    %v92 = vld [vmem:[#allocation8] sm:$0xff]
    %v93 = vld [vmem:[#allocation8 + $0x8] sm:$0xff]
    %v94 = vld [vmem:[#allocation8 + $0x10] sm:$0xff]
    %v95 = vld [vmem:[#allocation8 + $0x18] sm:$0xff]
    %vm96 = vcmask 261120
    %v98 = vsel %vm96, %v88, 0
    %v101 = vsel %vm96, %v89, 0
    %103 = vmatprep.subr.mxu0 0.0
    %104 = vmatpush1.msra.mxu0 %v92
    %105 = vmatprep.subr.mxu0 0.0
    %106 = vmatpush1.msra.mxu0 %v93
    %107 = vmatprep.subr.mxu0 0.0
    %108 = vmatpush1.msra.mxu0 %v94
    %109 = vmatprep.subr.mxu0 0.0
    %110 = vmatpush1.msra.mxu0 %v95
    %111 = vmatprep.subr.mxu0 0.0
    %112 = vmatpush1.msra.mxu0 0.0
    %113 = vmatprep.subr.mxu0 0.0
    %114 = vmatpush1.msra.mxu0 0.0
    %115 = vmatprep.subr.mxu0 0.0
    %116 = vmatpush1.msra.mxu0 0.0
    %117 = vmatprep.subr.mxu0 0.0
    %118 = vmatpush1.msra.mxu0 0.0
    %119 = vmatprep.subr.mxu0 0.0
    %120 = vmatpush1.msra.mxu0 0.0
    %121 = vmatprep.subr.mxu0 0.0
    %122 = vmatpush1.msra.mxu0 0.0
    %123 = vmatprep.subr.mxu0 0.0
    %124 = vmatpush1.msra.mxu0 0.0
    %125 = vmatprep.subr.mxu0 0.0
    %126 = vmatpush1.msra.mxu0 0.0
    %127 = vmatprep.subr.mxu0 0.0
    %128 = vmatpush1.msra.mxu0 0.0
    %129 = vmatprep.subr.mxu0 0.0
    %130 = vmatpush1.msra.mxu0 0.0
    %131 = vmatprep.subr.mxu0 0.0
    %132 = vmatpush1.msra.mxu0 0.0
    %133 = vmatprep.subr.mxu0 0.0
    %134 = vmatpush1.msra.mxu0 0.0
    %135 = vmatprep.subr.mxu0 0.0
    %136 = vmatpush1.msra.mxu0 0.0
    %137 = vmatprep.subr.mxu0 0.0
    %138 = vmatpush1.msra.mxu0 0.0
    %139 = vmatprep.subr.mxu0 0.0
    %140 = vmatpush1.msra.mxu0 0.0
    %141 = vmatprep.subr.mxu0 0.0
    %142 = vmatpush1.msra.mxu0 0.0
    %143 = vmatprep.subr.mxu0 0.0
    %144 = vmatpush1.msra.mxu0 0.0
    %145 = vmatprep.subr.mxu0 0.0
    %146 = vmatpush1.msra.mxu0 0.0
    %147 = vmatprep.subr.mxu0 0.0
    %148 = vmatpush1.msra.mxu0 0.0
    %149 = vmatprep.subr.mxu0 0.0
    %150 = vmatpush1.msra.mxu0 0.0
    %151 = vmatprep.subr.mxu0 0.0
    %152 = vmatpush1.msra.mxu0 0.0
    %153 = vmatprep.subr.mxu0 0.0
    %154 = vmatpush1.msra.mxu0 0.0
    %155 = vmatprep.subr.mxu0 0.0
    %156 = vmatpush1.msra.mxu0 0.0
    %157 = vmatprep.subr.mxu0 0.0
    %158 = vmatpush1.msra.mxu0 0.0
    %159 = vmatprep.subr.mxu0 0.0
    %160 = vmatpush1.msra.mxu0 0.0
    %161 = vmatprep.subr.mxu0 0.0
    %162 = vmatpush1.msra.mxu0 0.0
    %163 = vmatprep.subr.mxu0 0.0
    %164 = vmatpush1.msra.mxu0 0.0
    %165 = vmatprep.subr.mxu0 0.0
    %166 = vmatpush1.msra.mxu0 0.0
    %167 = vmatprep.mubr.f32.mxu0 0.0
    %168 = vmatmul.mubr.f32.gmra.mrb[0].mxu0 %v98
    %v169 = vpop.f32.mrb[0].mxu0
    %v170 = vadd.f32 0.0, %v169
    %v171 = vpop.f32.mrb[0].mxu0
    %172 = vmatprep.mubr.f32.mxu0 0.0
    %173 = vmatmul.mubr.f32.gmra.mrb[0].mxu0 %v101
    %v174 = vpop.f32.mrb[0].mxu0
    %v175 = vadd.f32 0.0, %v174
    %v176 = vpop.f32.mrb[0].mxu0
    %177 = vdwg.mxu0
    %v178 = vadd.f32 %v90, %v170
    %v179 = vadd.f32 %v91, %v175
    %vm180 = vcmask 523264
    %181 = vst.msk [vmem:[#allocation2] sm:$0xff] %vm180, %v178
    %182 = vst.msk [vmem:[#allocation2 + $0x8] sm:$0xff] %vm180, %v179
    %v183 = vld [vmem:[#allocation3] sm:$0xff]
    %v184 = vld [vmem:[#allocation3 + $0x8] sm:$0xff]
    %v185 = vld [vmem:[#allocation10] sm:$0xff]
    %v186 = vld [vmem:[#allocation10 + $0x8] sm:$0xff]
    %v187 = vld [vmem:[#allocation10 + $0x10] sm:$0xff]
    %v188 = vld [vmem:[#allocation10 + $0x18] sm:$0xff]
    %189 = vmatprep.subr.mxu0 0.0
    %190 = vmatpush1.msra.mxu0 %v185
    %191 = vmatprep.subr.mxu0 0.0
    %192 = vmatpush1.msra.mxu0 %v186
    %193 = vmatprep.subr.mxu0 0.0
    %194 = vmatpush1.msra.mxu0 %v187
    %195 = vmatprep.subr.mxu0 0.0
    %196 = vmatpush1.msra.mxu0 %v188
    %197 = vmatprep.subr.mxu0 0.0
    %198 = vmatpush1.msra.mxu0 0.0
    %199 = vmatprep.subr.mxu0 0.0
    %200 = vmatpush1.msra.mxu0 0.0
    %201 = vmatprep.subr.mxu0 0.0
    %202 = vmatpush1.msra.mxu0 0.0
    %203 = vmatprep.subr.mxu0 0.0
    %204 = vmatpush1.msra.mxu0 0.0
    %205 = vmatprep.subr.mxu0 0.0
    %206 = vmatpush1.msra.mxu0 0.0
    %207 = vmatprep.subr.mxu0 0.0
    %208 = vmatpush1.msra.mxu0 0.0
    %209 = vmatprep.subr.mxu0 0.0
    %210 = vmatpush1.msra.mxu0 0.0
    %211 = vmatprep.subr.mxu0 0.0
    %212 = vmatpush1.msra.mxu0 0.0
    %213 = vmatprep.subr.mxu0 0.0
    %214 = vmatpush1.msra.mxu0 0.0
    %215 = vmatprep.subr.mxu0 0.0
    %216 = vmatpush1.msra.mxu0 0.0
    %217 = vmatprep.subr.mxu0 0.0
    %218 = vmatpush1.msra.mxu0 0.0
    %219 = vmatprep.subr.mxu0 0.0
    %220 = vmatpush1.msra.mxu0 0.0
    %221 = vmatprep.subr.mxu0 0.0
    %222 = vmatpush1.msra.mxu0 0.0
    %223 = vmatprep.subr.mxu0 0.0
    %224 = vmatpush1.msra.mxu0 0.0
    %225 = vmatprep.subr.mxu0 0.0
    %226 = vmatpush1.msra.mxu0 0.0
    %227 = vmatprep.subr.mxu0 0.0
    %228 = vmatpush1.msra.mxu0 0.0
    %229 = vmatprep.subr.mxu0 0.0
    %230 = vmatpush1.msra.mxu0 0.0
    %231 = vmatprep.subr.mxu0 0.0
    %232 = vmatpush1.msra.mxu0 0.0
    %233 = vmatprep.subr.mxu0 0.0
    %234 = vmatpush1.msra.mxu0 0.0
    %235 = vmatprep.subr.mxu0 0.0
    %236 = vmatpush1.msra.mxu0 0.0
    %237 = vmatprep.subr.mxu0 0.0
    %238 = vmatpush1.msra.mxu0 0.0
    %239 = vmatprep.subr.mxu0 0.0
    %240 = vmatpush1.msra.mxu0 0.0
    %241 = vmatprep.subr.mxu0 0.0
    %242 = vmatpush1.msra.mxu0 0.0
    %243 = vmatprep.subr.mxu0 0.0
    %244 = vmatpush1.msra.mxu0 0.0
    %245 = vmatprep.subr.mxu0 0.0
    %246 = vmatpush1.msra.mxu0 0.0
    %247 = vmatprep.subr.mxu0 0.0
    %248 = vmatpush1.msra.mxu0 0.0
    %249 = vmatprep.subr.mxu0 0.0
    %250 = vmatpush1.msra.mxu0 0.0
    %251 = vmatprep.subr.mxu0 0.0
    %252 = vmatpush1.msra.mxu0 0.0
    %253 = vmatprep.mubr.f32.mxu0 0.0
    %254 = vmatmul.mubr.f32.gmra.mrb[0].mxu0 %v98
    %v255 = vpop.f32.mrb[0].mxu0
    %v256 = vadd.f32 0.0, %v255
    %v257 = vpop.f32.mrb[0].mxu0
    %258 = vmatprep.mubr.f32.mxu0 0.0
    %259 = vmatmul.mubr.f32.gmra.mrb[0].mxu0 %v101
    %v260 = vpop.f32.mrb[0].mxu0
    %v261 = vadd.f32 0.0, %v260
    %v262 = vpop.f32.mrb[0].mxu0
    %263 = vdwg.mxu0
    %v264 = vadd.f32 %v183, %v256
    %v265 = vadd.f32 %v184, %v261
    %266 = vst.msk [vmem:[#allocation3] sm:$0xff] %vm180, %v264
    %267 = vst.msk [vmem:[#allocation3 + $0x8] sm:$0xff] %vm180, %v265
    %v268 = vld [vmem:[#allocation4] sm:$0xff]
    %v269 = vld [vmem:[#allocation4 + $0x8] sm:$0xff]
    %v270 = vld [vmem:[#allocation11] sm:$0xff]
    %v271 = vld [vmem:[#allocation11 + $0x8] sm:$0xff]
    %v272 = vld [vmem:[#allocation11 + $0x10] sm:$0xff]
    %v273 = vld [vmem:[#allocation11 + $0x18] sm:$0xff]
    %274 = vmatprep.subr.mxu0 0.0
    %275 = vmatpush1.msra.mxu0 %v270
    %276 = vmatprep.subr.mxu0 0.0
    %277 = vmatpush1.msra.mxu0 %v271
    %278 = vmatprep.subr.mxu0 0.0
    %279 = vmatpush1.msra.mxu0 %v272
    %280 = vmatprep.subr.mxu0 0.0
    %281 = vmatpush1.msra.mxu0 %v273
    %282 = vmatprep.subr.mxu0 0.0
    %283 = vmatpush1.msra.mxu0 0.0
    %284 = vmatprep.subr.mxu0 0.0
    %285 = vmatpush1.msra.mxu0 0.0
    %286 = vmatprep.subr.mxu0 0.0
    %287 = vmatpush1.msra.mxu0 0.0
    %288 = vmatprep.subr.mxu0 0.0
    %289 = vmatpush1.msra.mxu0 0.0
    %290 = vmatprep.subr.mxu0 0.0
    %291 = vmatpush1.msra.mxu0 0.0
    %292 = vmatprep.subr.mxu0 0.0
    %293 = vmatpush1.msra.mxu0 0.0
    %294 = vmatprep.subr.mxu0 0.0
    %295 = vmatpush1.msra.mxu0 0.0
    %296 = vmatprep.subr.mxu0 0.0
    %297 = vmatpush1.msra.mxu0 0.0
    %298 = vmatprep.subr.mxu0 0.0
    %299 = vmatpush1.msra.mxu0 0.0
    %300 = vmatprep.subr.mxu0 0.0
    %301 = vmatpush1.msra.mxu0 0.0
    %302 = vmatprep.subr.mxu0 0.0
    %303 = vmatpush1.msra.mxu0 0.0
    %304 = vmatprep.subr.mxu0 0.0
    %305 = vmatpush1.msra.mxu0 0.0
    %306 = vmatprep.subr.mxu0 0.0
    %307 = vmatpush1.msra.mxu0 0.0
    %308 = vmatprep.subr.mxu0 0.0
    %309 = vmatpush1.msra.mxu0 0.0
    %310 = vmatprep.subr.mxu0 0.0
    %311 = vmatpush1.msra.mxu0 0.0
    %312 = vmatprep.subr.mxu0 0.0
    %313 = vmatpush1.msra.mxu0 0.0
    %314 = vmatprep.subr.mxu0 0.0
    %315 = vmatpush1.msra.mxu0 0.0
    %316 = vmatprep.subr.mxu0 0.0
    %317 = vmatpush1.msra.mxu0 0.0
    %318 = vmatprep.subr.mxu0 0.0
    %319 = vmatpush1.msra.mxu0 0.0
    %320 = vmatprep.subr.mxu0 0.0
    %321 = vmatpush1.msra.mxu0 0.0
    %322 = vmatprep.subr.mxu0 0.0
    %323 = vmatpush1.msra.mxu0 0.0
    %324 = vmatprep.subr.mxu0 0.0
    %325 = vmatpush1.msra.mxu0 0.0
    %326 = vmatprep.subr.mxu0 0.0
    %327 = vmatpush1.msra.mxu0 0.0
    %328 = vmatprep.subr.mxu0 0.0
    %329 = vmatpush1.msra.mxu0 0.0
    %330 = vmatprep.subr.mxu0 0.0
    %331 = vmatpush1.msra.mxu0 0.0
    %332 = vmatprep.subr.mxu0 0.0
    %333 = vmatpush1.msra.mxu0 0.0
    %334 = vmatprep.subr.mxu0 0.0
    %335 = vmatpush1.msra.mxu0 0.0
    %336 = vmatprep.subr.mxu0 0.0
    %337 = vmatpush1.msra.mxu0 0.0
    %338 = vmatprep.mubr.f32.mxu0 0.0
    %339 = vmatmul.mubr.f32.gmra.mrb[0].mxu0 %v98
    %v340 = vpop.f32.mrb[0].mxu0
    %v341 = vadd.f32 0.0, %v340
    %v342 = vpop.f32.mrb[0].mxu0
    %343 = vmatprep.mubr.f32.mxu0 0.0
    %344 = vmatmul.mubr.f32.gmra.mrb[0].mxu0 %v101
    %v345 = vpop.f32.mrb[0].mxu0
    %v346 = vadd.f32 0.0, %v345
    %v347 = vpop.f32.mrb[0].mxu0
    %348 = vdwg.mxu0
    %v349 = vadd.f32 %v268, %v341
    %v350 = vadd.f32 %v269, %v346
    %351 = vst.msk [vmem:[#allocation4] sm:$0xff] %vm180, %v349
    %352 = vst.msk [vmem:[#allocation4 + $0x8] sm:$0xff] %vm180, %v350
    // Predicated region
    $region38: #{tpu_custom_call.1} parent=1 // pred_check
      %p353 = pneg %p77
    $region39: #{tpu_custom_call.1} parent=1 // pred_check_branch
      %355 = sbr.rel (%p353) target = $region41
    $region40: #{tpu_custom_call.1} parent=1 // pred_region
      %v356 = vld [vmem:[#allocation2] sm:$0xff]
      %v357 = vld [vmem:[#allocation2 + $0x8] sm:$0xff]
      %358 = vst.msk [vmem:[#allocation13] sm:$0xff] %vm180, %v356
      %359 = vst.msk [vmem:[#allocation13 + $0x8] sm:$0xff] %vm180, %v357
      %v360 = vld [vmem:[#allocation3] sm:$0xff]
      %v361 = vld [vmem:[#allocation3 + $0x8] sm:$0xff]
      %362 = vst.msk [vmem:[#allocation14] sm:$0xff] %vm180, %v360
      %363 = vst.msk [vmem:[#allocation14 + $0x8] sm:$0xff] %vm180, %v361
      %v364 = vld [vmem:[#allocation4] sm:$0xff]
      %v365 = vld [vmem:[#allocation4 + $0x8] sm:$0xff]
      %366 = vst.msk [vmem:[#allocation16] sm:$0xff] %vm180, %v364
      %367 = vst.msk [vmem:[#allocation16 + $0x8] sm:$0xff] %vm180, %v365
    $region41: #{tpu_custom_call.1} parent=1 // pred_fallthru
      _
    // Predicated region
    $region42: #{tpu_custom_call.1} parent=1 // pred_check
      _
    $region43: #{tpu_custom_call.1} parent=1 // pred_check_branch
      %369 = sbr.rel (0) target = $region45
    $region44: #{tpu_custom_call.1} parent=1 // pred_region
      %s371 = ssub.s32 256, 256
      %372 = vsyncadd [#allocation7], %s371
      %s373 = sshll.u32 [#allocation13], 4
      %s374 = int_to_ptr.vmem [resolvable:$true] %s373
      %379 = dma.vmem_to_hbm [thread:$0]  %s374, 256, %s4, [#allocation7], 128, 128, 8
    $region45: #{tpu_custom_call.1} parent=1 // pred_fallthru
      _
    // Predicated region
    $region46: #{tpu_custom_call.1} parent=1 // pred_check
      _
    $region47: #{tpu_custom_call.1} parent=1 // pred_check_branch
      %381 = sbr.rel (0) target = $region49
    $region48: #{tpu_custom_call.1} parent=1 // pred_region
      %s383 = ssub.s32 256, 256
      %384 = vsyncadd [#allocation15], %s383
      %s385 = sshll.u32 [#allocation14], 4
      %s386 = int_to_ptr.vmem [resolvable:$true] %s385
      %391 = dma.vmem_to_hbm [thread:$0]  %s386, 256, %s5, [#allocation15], 128, 128, 8
    $region49: #{tpu_custom_call.1} parent=1 // pred_fallthru
      _
    // Predicated region
    $region50: #{tpu_custom_call.1} parent=1 // pred_check
      _
    $region51: #{tpu_custom_call.1} parent=1 // pred_check_branch
      %393 = sbr.rel (0) target = $region53
    $region52: #{tpu_custom_call.1} parent=1 // pred_region
      %s395 = ssub.s32 256, 256
      %396 = vsyncadd [#allocation15], %s395
      %s397 = sshll.u32 [#allocation16], 4
      %s398 = int_to_ptr.vmem [resolvable:$true] %s397
      %403 = dma.vmem_to_hbm [thread:$0]  %s398, 256, %s6, [#allocation15], 128, 128, 8
    $region53: #{tpu_custom_call.1} parent=1 // pred_fallthru
      _
    // Predicated region
    $region54: #{tpu_custom_call.1} parent=1 // pred_check
      _
    $region55: #{tpu_custom_call.1} parent=1 // pred_check_branch
      %405 = sbr.rel (0) target = $region57
    $region56: #{tpu_custom_call.1} parent=1 // pred_region
      %406 = dma.done [#allocation7], 256
    $region57: #{tpu_custom_call.1} parent=1 // pred_fallthru
      _
    // Predicated region
    $region58: #{tpu_custom_call.1} parent=1 // pred_check
      _
    $region59: #{tpu_custom_call.1} parent=1 // pred_check_branch
      %408 = sbr.rel (0) target = $region61
    $region60: #{tpu_custom_call.1} parent=1 // pred_region
      %409 = dma.done [#allocation15], 256
    $region61: #{tpu_custom_call.1} parent=1 // pred_fallthru
      _
    // Predicated region
    $region62: #{tpu_custom_call.1} parent=1 // pred_check
      _
    $region63: #{tpu_custom_call.1} parent=1 // pred_check_branch
      %411 = sbr.rel (0) target = $region65
    $region64: #{tpu_custom_call.1} parent=1 // pred_region
      %412 = dma.done [#allocation15], 256
    $region65: #{tpu_custom_call.1} parent=1 // pred_fallthru
      _
    %413 = vsyncpa [#allocation6], 1
    %414 = vsyncpa [#allocation9], 1
    %415 = vsyncpa [#allocation12], 1
    %416 = vsyncpa [#allocation7], 1
    %417 = vsyncpa [#allocation15], 1

</llo_original>
